<compile_context>
chip_gen: v7x
topology: tpu7x:2x2x1
jax: 0.10.0
libtpu: 0.0.40
codegen_flags: <defaults>
</compile_context>

<pallas_src>
import jax
import jax.numpy as jnp
from jax.experimental import pallas as pl
from jax.experimental.pallas import tpu as pltpu


def critic_kernel(x_ref, w1_ref, b1_ref, w2r_ref, b2_ref, o_ref):
    """One batch tile of: value = relu(x @ W1 + b1) @ w2 + b2.

    x_ref:   (TB, obs_dim)  state tile (f32 or bf16 stream)
    w1_ref:  (obs_dim, H)   hidden weight, [in, out] layout (same dtype as x)
    b1_ref:  (1, H)         hidden bias, f32, VMEM
    w2r_ref: (1, H)         output weight as a lane row, f32, VMEM
    b2_ref:  (1,)           output bias, f32 scalar in SMEM
    o_ref:   (1, TB)        lane-dense value tile, f32
    """
    # Layer 1 on the MXU; always accumulate in f32 regardless of stream dtype.
    h = jnp.dot(x_ref[...], w1_ref[...], preferred_element_type=jnp.float32)
    # Bias + ReLU in f32 on the VPU (v5e has no bf16 VPU ops).
    h = jnp.maximum(h + b1_ref[...], 0.0)
    # Value head (out_features == 1): VPU multiply + XLU lane reduction instead
    # of an N=1 MXU matmul. The (TB,) result is lane-major, so the store below
    # is a full unmasked 128-lane store into the (1, TB) output block.
    v = jnp.sum(h * w2r_ref[...], axis=-1) + b2_ref[0]
    o_ref[...] = v[None, :].astype(o_ref.dtype)


def _pick_tile_b(B, obs_dim, hidden, *, max_rows=8192, vmem_budget_bytes=8 << 20):
    """Largest lane-dense (multiple-of-128) batch tile that divides B, capped so
    the double-buffered state stream + hidden activations + output stay well
    under the scoped-VMEM default on every TPU generation (v7x: 64 MiB total)."""
    if B % 128 != 0:
        return B  # single full-extent block (valid tiling: equals the full dim)
    # f32 upper bound: 2x-buffered state row + hidden row + 2x-buffered out row.
    per_row_bytes = (2 * obs_dim + hidden + 2) * 4
    cap = min(max_rows, max(128, vmem_budget_bytes // per_row_bytes))
    tile = min(B, cap)
    tile -= tile % 128
    tile = max(tile, 128)
    while B % tile != 0:
        tile -= 128
    return tile


def critic_forward(state, w1, b1, w2, b2, *, tile_b=None):
    """state: [B, obs_dim] (f32 or bf16) -> value: [B, 1] f32.

    Weights are stored transposed vs torch: w1 is [obs_dim, H], w2 is [H, 1].
    For bandwidth-bound production batches on v6e/v7x, pass `state`/`w1` already
    cast to bf16 (accumulation inside the kernel is always f32).
    """
    B, obs_dim = state.shape
    H = w1.shape[1]
    assert w1.shape == (obs_dim, H)

    b1_row = jnp.asarray(b1, jnp.float32).reshape(1, H)
    w2_row = jnp.asarray(w2, jnp.float32).reshape(1, H)   # value head as a lane row
    b2_s = jnp.asarray(b2, jnp.float32).reshape(1)        # SMEM scalar

    if tile_b is None:
        tile_b = _pick_tile_b(B, obs_dim, H)
    # (8,128)-tiling rule: tile must be lane-aligned (128) unless it is the
    # whole batch, and it must divide B.
    assert tile_b == B or (tile_b % 128 == 0 and B % tile_b == 0), (
        f"tile_b={tile_b} must equal B={B} or be a multiple of 128 dividing B")
    grid = (B // tile_b,)

    out_row = pl.pallas_call(
        critic_kernel,
        out_shape=jax.ShapeDtypeStruct((1, B), jnp.float32),
        grid_spec=pltpu.PrefetchScalarGridSpec(
            num_scalar_prefetch=0,
            grid=grid,
            in_specs=[
                pl.BlockSpec((tile_b, obs_dim), lambda i: (i, 0)),  # state tile
                pl.BlockSpec((obs_dim, H), lambda i: (0, 0)),       # W1 (grid-invariant)
                pl.BlockSpec((1, H), lambda i: (0, 0)),             # b1
                pl.BlockSpec((1, H), lambda i: (0, 0)),             # w2 row
                pl.BlockSpec(memory_space=pltpu.MemorySpace.SMEM),  # b2 scalar
            ],
            out_specs=pl.BlockSpec((1, tile_b), lambda i: (0, i)),  # lane-dense
        ),
        compiler_params=pltpu.CompilerParams(
            dimension_semantics=("parallel",)),
    )(state, w1, b1_row, w2_row, b2_s)

    # (1, B) row-major -> (B, 1): pure metadata reshape in the wrapper.
    return out_row.reshape(B, 1)


def init_params(key, obs_dim, hidden_size):
    """Deterministic init matching torch.nn.Linear default U(-1/sqrt(fan_in), 1/sqrt(fan_in))."""
    k1, k2, k3, k4 = jax.random.split(key, 4)
    bound1 = 1.0 / jnp.sqrt(obs_dim)
    bound2 = 1.0 / jnp.sqrt(hidden_size)
    # stored as [in, out] (transpose of torch's [out, in])
    w1 = jax.random.uniform(k1, (obs_dim, hidden_size), jnp.float32, -bound1, bound1)
    b1 = jax.random.uniform(k2, (1, hidden_size), jnp.float32, -bound1, bound1)
    w2 = jax.random.uniform(k3, (hidden_size, 1), jnp.float32, -bound2, bound2)
    b2 = jax.random.uniform(k4, (1,), jnp.float32, -bound2, bound2)
    return w1, b1, w2, b2


if __name__ == "__main__":
    key = jax.random.PRNGKey(0)
    B, obs_dim, hidden_size = 256, 16, 32

    k_state, k_params = jax.random.split(key)
    state = jax.random.normal(k_state, (B, obs_dim), jnp.float32)
    w1, b1, w2, b2 = init_params(k_params, obs_dim, hidden_size)

    # Pure-JAX reference (value head done elementwise to mirror kernel math).
    h_ref = jnp.maximum(state @ w1 + b1, 0.0)
    ref = jnp.sum(h_ref * w2.reshape(1, -1), axis=-1, keepdims=True) + b2

    # f32 path with an explicit 2-step grid (exercises tiling, pipelining and
    # the lane-dense blocked output store).
    value = jax.block_until_ready(critic_forward(state, w1, b1, w2, b2, tile_b=128))
    assert value.shape == (B, 1)
    assert jnp.allclose(value, ref, atol=1e-4, rtol=1e-4)

    # bf16 input-stream path (v6e/v7x bandwidth optimization); f32 accumulate.
    value_bf16 = jax.block_until_ready(
        critic_forward(state.astype(jnp.bfloat16), w1.astype(jnp.bfloat16), b1, w2, b2))
    assert value_bf16.shape == (B, 1)
    assert jnp.allclose(value_bf16, ref, atol=5e-2, rtol=5e-2)

    print("KERNEL_OK")
</pallas_src>

<mosaic_0001>
module attributes {stable_mosaic.version = 11 : i64} {
  func.func @critic_kernel(%arg0: i32, %arg1: memref<128x16xf32, #tpu.memory_space<vmem>>, %arg2: memref<16x32xf32, #tpu.memory_space<vmem>>, %arg3: memref<1x32xf32, #tpu.memory_space<vmem>>, %arg4: memref<1x32xf32, #tpu.memory_space<vmem>>, %arg5: memref<1xf32, #tpu.memory_space<smem>>, %arg6: memref<1x128xf32, #tpu.memory_space<vmem>>) attributes {dimension_semantics = [#tpu.dimension_semantics<parallel>], iteration_bounds = array<i64: 2>, scalar_prefetch = 0 : i64, scratch_operands = 0 : i64, tpu.core_type = #tpu.core_type<tc>, window_params = [{transform_indices = @transform_0, window_bounds = array<i64: 128, 16>}, {pipeline_mode = #tpu.pipeline_mode<synchronous>, transform_indices = @transform_1, window_bounds = array<i64: 16, 32>}, {pipeline_mode = #tpu.pipeline_mode<synchronous>, transform_indices = @transform_2, window_bounds = array<i64: 1, 32>}, {pipeline_mode = #tpu.pipeline_mode<synchronous>, transform_indices = @transform_3, window_bounds = array<i64: 1, 32>}, {transform_indices = @transform_4, window_bounds = array<i64: 1>}, {transform_indices = @transform_5, window_bounds = array<i64: 1, 128>}]} {
    %c0 = arith.constant 0 : index
    %c0_0 = arith.constant 0 : index
    %0 = vector.load %arg1[%c0, %c0_0] : memref<128x16xf32, #tpu.memory_space<vmem>>, vector<128x16xf32>
    %c0_1 = arith.constant 0 : index
    %c0_2 = arith.constant 0 : index
    %1 = vector.load %arg2[%c0_1, %c0_2] : memref<16x32xf32, #tpu.memory_space<vmem>>, vector<16x32xf32>
    %cst = arith.constant dense<0.000000e+00> : vector<128x32xf32>
    %2 = tpu.matmul %0, %1, %cst {dimension_numbers = #tpu.dot_dimension_numbers<[1], [0], [0], [1], [0, 0, 1, 1], [], []>} : vector<128x16xf32>, vector<16x32xf32>, vector<128x32xf32> -> vector<128x32xf32>
    %c0_3 = arith.constant 0 : index
    %c0_4 = arith.constant 0 : index
    %3 = vector.load %arg3[%c0_3, %c0_4] : memref<1x32xf32, #tpu.memory_space<vmem>>, vector<1x32xf32>
    %4 = vector.broadcast %3 : vector<1x32xf32> to vector<128x32xf32>
    %5 = arith.addf %2, %4 : vector<128x32xf32>
    %cst_5 = arith.constant 0.000000e+00 : f32
    %6 = vector.broadcast %cst_5 : f32 to vector<128x32xf32>
    %7 = arith.maximumf %5, %6 : vector<128x32xf32>
    %c0_6 = arith.constant 0 : index
    %c0_7 = arith.constant 0 : index
    %8 = vector.load %arg4[%c0_6, %c0_7] : memref<1x32xf32, #tpu.memory_space<vmem>>, vector<1x32xf32>
    %9 = vector.broadcast %8 : vector<1x32xf32> to vector<128x32xf32>
    %10 = arith.mulf %7, %9 : vector<128x32xf32>
    %cst_8 = arith.constant dense<0.000000e+00> : vector<128xf32>
    %11 = vector.multi_reduction <add>, %10, %cst_8 [1] : vector<128x32xf32> to vector<128xf32>
    %c0_9 = arith.constant 0 : index
    %12 = memref.load %arg5[%c0_9] : memref<1xf32, #tpu.memory_space<smem>>
    %13 = vector.broadcast %12 : f32 to vector<128xf32>
    %14 = arith.addf %11, %13 : vector<128xf32>
    %15 = vector.shape_cast %14 : vector<128xf32> to vector<1x128xf32>
    %c0_10 = arith.constant 0 : index
    %c0_11 = arith.constant 0 : index
    %16 = vector.load %arg6[%c0_10, %c0_11] : memref<1x128xf32, #tpu.memory_space<vmem>>, vector<1x128xf32>
    tpu.vector_store %arg6[%c0_10, %c0_11], %15 {strides = array<i32>} : memref<1x128xf32, #tpu.memory_space<vmem>>, vector<1x128xf32>,
    return
  }
  func.func @transform_0(%arg0: i32) -> (i32, i32) {
    %c0_i32 = arith.constant 0 : i32
    %c0_i32_0 = arith.constant 0 : i32
    return %arg0, %c0_i32 : i32, i32
  }
  func.func @transform_1(%arg0: i32) -> (i32, i32) {
    %c0_i32 = arith.constant 0 : i32
    %c0_i32_0 = arith.constant 0 : i32
    %c0_i32_1 = arith.constant 0 : i32
    return %c0_i32, %c0_i32_0 : i32, i32
  }
  func.func @transform_2(%arg0: i32) -> (i32, i32) {
    %c0_i32 = arith.constant 0 : i32
    %c0_i32_0 = arith.constant 0 : i32
    %c0_i32_1 = arith.constant 0 : i32
    return %c0_i32, %c0_i32_0 : i32, i32
  }
  func.func @transform_3(%arg0: i32) -> (i32, i32) {
    %c0_i32 = arith.constant 0 : i32
    %c0_i32_0 = arith.constant 0 : i32
    %c0_i32_1 = arith.constant 0 : i32
    return %c0_i32, %c0_i32_0 : i32, i32
  }
  func.func @transform_4(%arg0: i32) -> i32 {
    %c0_i32 = arith.constant 0 : i32
    %c0_i32_0 = arith.constant 0 : i32
    return %c0_i32 : i32
  }
  func.func @transform_5(%arg0: i32) -> (i32, i32) {
    %c0_i32 = arith.constant 0 : i32
    %c0_i32_0 = arith.constant 0 : i32
    return %c0_i32, %arg0 : i32, i32
  }
}

</mosaic_0001>

<llo_original>
// kernel: tpu_custom_call.1
$region0: #{tpu_custom_call.1}
  #allocation0 [shape = 'u32[]', space=smem, size = 0x4, offset = 0x4, fixed_abs, tag = 'smem constant byte address 0x4 - core index']
  #allocation1 [shape = 'u32[144,128]{1,0:T(1,128)}', space=vmem, size = 0x12000, scoped, tag = 'internal scratch']
  #allocation2 [shape = 'f32[1]{0:T(128)S(6)}', space=smem, size = 0x200, scoped, tag = 'scoped memory for tpu_custom_call.1']
  %s0 = inlined_call_operand.vmem [shape: f32[256,16], index: 0, kind: input, shape index: {}]
  %s1 = inlined_call_operand.vmem [shape: f32[16,32], index: 1, kind: input, shape index: {}]
  %s2 = inlined_call_operand.vmem [shape: f32[1,32], index: 2, kind: input, shape index: {}]
  %s3 = inlined_call_operand.vmem [shape: f32[1,32], index: 3, kind: input, shape index: {}]
  %s4 = inlined_call_operand.<no memory space> [shape: f32[1], index: 4, kind: input, shape index: {}]
  %s5 = inlined_call_operand.hbm [shape: f32[1,256], index: 5, kind: output, shape index: {}]
  %s6 = sld [smem:[#allocation0]]
  $region53: #{tpu_custom_call.1} parent=0
    _
  %s8 = ssub.s32 1, %s6
  %s9 = scalar_select 0, %s8, %s6
  %10 = sst [smem:[#allocation2]] %s4
  $region1: #{tpu_custom_call.1} parent=0
    #allocation3 [shape = 'u8[1024]{0}', space=vmem, size = 0x400, scoped, tag = 'output window, operand 0']
    #allocation4 [shape = 's32[2]{0}', space=sflag, size = 0x8, scoped, tag = 'scoped memory for tpu_custom_call.1']
    %11 = vsyncpa [#allocation4], 0
    %s12 = scalar_lea.sflag [#allocation4], 1
    %13 = vsyncpa %s12, 0
    loop: start=0, step=1, limit=4
    $region2: #{tpu_custom_call.1} parent=1 // loop_pre_header
      _
    $region3: #{tpu_custom_call.1} parent=1 // loop_header
      %s15 = sphi 0, %s19
      %p16 = scmp.ge.s32.totalorder %s15, 4
      %s25 = sphi 0, %s27
      %s28 = sphi 0, %s25
      %s29 = sphi 0, %s28
      %s45 = sphi 0, %s29
      %s49 = sphi 0, %s49
      %s51 = sphi 0, %s49
      %s52 = sphi 0, %s51
      %s66 = sphi 0, %s52
      %s70 = sphi 0, %s70
      %s72 = sphi 0, %s70
      %s73 = sphi 0, %s72
      %s87 = sphi 0, %s73
      %s91 = sphi 0, %s91
      %s93 = sphi 0, %s91
      %s94 = sphi 0, %s93
      %s108 = sphi 0, %s94
      %s112 = sphi 0, %s112
      %s114 = sphi 0, %s112
      %s115 = sphi 0, %s114
      %s129 = sphi 0, %s115
      %s135 = sphi 0, %s137
      %s138 = sphi 0, %s135
      %s139 = sphi 0, %s138
      %s155 = sphi 0, %s139
    $region4: #{tpu_custom_call.1} parent=1 // loop_header_branch
      %18 = sbr.rel (%p16) target = $region8
    $region5: #{tpu_custom_call.1} parent=1 // loop_body
      %s20 = ssub.s32 %s15, 1
      %s21 = ssub.s32 %s15, 2
      %s22 = sadd.s32 %s15, 1
      %s23 = ssub.s32 %s15, %s22
      %p24 = scmp.eq.s32.totalorder %s23, 0
      %s26 = sadd.s32 %s25, 1
      %s27 = scalar_select %p24, %s25, %s26
      %p30 = pneg %p24
      %p31 = scmp.eq.s32.totalorder %s15, 1
      %p32 = por %p30, %p31
      %p33 = scmp.ne.s32.totalorder %s25, %s28
      %p34 = scmp.eq.s32.totalorder %s15, 0
      %p35 = por %p33, %p34
      %p36 = scmp.ne.s32.totalorder %s25, %s28
      %p37 = scmp.eq.s32.totalorder %s20, 1
      %p38 = por %p36, %p37
      %p39 = scmp.ne.s32.totalorder %s28, %s29
      %p40 = scmp.eq.s32.totalorder %s20, 0
      %p41 = por %p39, %p40
      %p42 = scmp.ne.s32.totalorder %s28, %s29
      %p43 = scmp.eq.s32.totalorder %s21, 1
      %p44 = por %p42, %p43
      %p46 = scmp.ne.s32.totalorder %s29, %s45
      %p47 = scmp.eq.s32.totalorder %s21, 0
      %p48 = por %p46, %p47
      %s50 = sadd.s32 %s49, 1
      %p53 = scmp.eq.s32.totalorder %s15, 1
      %p54 = scmp.ne.s32.totalorder %s49, %s51
      %p55 = scmp.eq.s32.totalorder %s15, 0
      %p56 = por %p54, %p55
      %p57 = scmp.ne.s32.totalorder %s49, %s51
      %p58 = scmp.eq.s32.totalorder %s20, 1
      %p59 = por %p57, %p58
      %p60 = scmp.ne.s32.totalorder %s51, %s52
      %p61 = scmp.eq.s32.totalorder %s20, 0
      %p62 = por %p60, %p61
      %p63 = scmp.ne.s32.totalorder %s51, %s52
      %p64 = scmp.eq.s32.totalorder %s21, 1
      %p65 = por %p63, %p64
      %p67 = scmp.ne.s32.totalorder %s52, %s66
      %p68 = scmp.eq.s32.totalorder %s21, 0
      %p69 = por %p67, %p68
      %s71 = sadd.s32 %s70, 1
      %p74 = scmp.eq.s32.totalorder %s15, 1
      %p75 = scmp.ne.s32.totalorder %s70, %s72
      %p76 = scmp.eq.s32.totalorder %s15, 0
      %p77 = por %p75, %p76
      %p78 = scmp.ne.s32.totalorder %s70, %s72
      %p79 = scmp.eq.s32.totalorder %s20, 1
      %p80 = por %p78, %p79
      %p81 = scmp.ne.s32.totalorder %s72, %s73
      %p82 = scmp.eq.s32.totalorder %s20, 0
      %p83 = por %p81, %p82
      %p84 = scmp.ne.s32.totalorder %s72, %s73
      %p85 = scmp.eq.s32.totalorder %s21, 1
      %p86 = por %p84, %p85
      %p88 = scmp.ne.s32.totalorder %s73, %s87
      %p89 = scmp.eq.s32.totalorder %s21, 0
      %p90 = por %p88, %p89
      %s92 = sadd.s32 %s91, 1
      %p95 = scmp.eq.s32.totalorder %s15, 1
      %p96 = scmp.ne.s32.totalorder %s91, %s93
      %p97 = scmp.eq.s32.totalorder %s15, 0
      %p98 = por %p96, %p97
      %p99 = scmp.ne.s32.totalorder %s91, %s93
      %p100 = scmp.eq.s32.totalorder %s20, 1
      %p101 = por %p99, %p100
      %p102 = scmp.ne.s32.totalorder %s93, %s94
      %p103 = scmp.eq.s32.totalorder %s20, 0
      %p104 = por %p102, %p103
      %p105 = scmp.ne.s32.totalorder %s93, %s94
      %p106 = scmp.eq.s32.totalorder %s21, 1
      %p107 = por %p105, %p106
      %p109 = scmp.ne.s32.totalorder %s94, %s108
      %p110 = scmp.eq.s32.totalorder %s21, 0
      %p111 = por %p109, %p110
      %s113 = sadd.s32 %s112, 1
      %p116 = scmp.eq.s32.totalorder %s15, 1
      %p117 = scmp.ne.s32.totalorder %s112, %s114
      %p118 = scmp.eq.s32.totalorder %s15, 0
      %p119 = por %p117, %p118
      %p120 = scmp.ne.s32.totalorder %s112, %s114
      %p121 = scmp.eq.s32.totalorder %s20, 1
      %p122 = por %p120, %p121
      %p123 = scmp.ne.s32.totalorder %s114, %s115
      %p124 = scmp.eq.s32.totalorder %s20, 0
      %p125 = por %p123, %p124
      %p126 = scmp.ne.s32.totalorder %s114, %s115
      %p127 = scmp.eq.s32.totalorder %s21, 1
      %p128 = por %p126, %p127
      %p130 = scmp.ne.s32.totalorder %s115, %s129
      %p131 = scmp.eq.s32.totalorder %s21, 0
      %p132 = por %p130, %p131
      %s133 = ssub.s32 %s15, %s22
      %p134 = scmp.eq.s32.totalorder %s133, 0
      %s136 = sadd.s32 %s135, 1
      %s137 = scalar_select %p134, %s135, %s136
      %p140 = pneg %p134
      %p141 = scmp.eq.s32.totalorder %s15, 1
      %p142 = por %p140, %p141
      %p143 = scmp.ne.s32.totalorder %s135, %s138
      %p144 = scmp.eq.s32.totalorder %s15, 0
      %p145 = por %p143, %p144
      %p146 = scmp.ne.s32.totalorder %s135, %s138
      %p147 = scmp.eq.s32.totalorder %s20, 1
      %p148 = por %p146, %p147
      %p149 = scmp.ne.s32.totalorder %s138, %s139
      %p150 = scmp.eq.s32.totalorder %s20, 0
      %p151 = por %p149, %p150
      %p152 = scmp.ne.s32.totalorder %s138, %s139
      %p153 = scmp.eq.s32.totalorder %s21, 1
      %p154 = por %p152, %p153
      %p156 = scmp.ne.s32.totalorder %s139, %s155
      %p157 = scmp.eq.s32.totalorder %s21, 0
      %p158 = por %p156, %p157
      %p159 = scmp.le.s32.totalorder 1, %s15
      %p160 = scmp.lt.s32.totalorder %s15, 3
      %p161 = pnand %p159, %p160
      %p162 = pneg %p161
      // Predicated region
      $region9: #{tpu_custom_call.1} parent=5 // pred_check
        _
      $region10: #{tpu_custom_call.1} parent=5 // pred_check_branch
        %164 = sbr.rel (%p161) target = $region12
      $region11: #{tpu_custom_call.1} parent=5 // pred_region
        %s165 = ssub.s32 %s15, 1
        // Predicated region
        $region13: #{tpu_custom_call.1} parent=11 // pred_check
          %p166 = pneg %p62
        $region14: #{tpu_custom_call.1} parent=11 // pred_check_branch
          %168 = sbr.rel (%p166) target = $region16
        $region15: #{tpu_custom_call.1} parent=11 // pred_region
          _
        $region16: #{tpu_custom_call.1} parent=11 // pred_fallthru
          _
        // Predicated region
        $region17: #{tpu_custom_call.1} parent=11 // pred_check
          %p169 = pneg %p83
        $region18: #{tpu_custom_call.1} parent=11 // pred_check_branch
          %171 = sbr.rel (%p169) target = $region20
        $region19: #{tpu_custom_call.1} parent=11 // pred_region
          _
        $region20: #{tpu_custom_call.1} parent=11 // pred_fallthru
          _
        // Predicated region
        $region21: #{tpu_custom_call.1} parent=11 // pred_check
          %p172 = pneg %p104
        $region22: #{tpu_custom_call.1} parent=11 // pred_check_branch
          %174 = sbr.rel (%p172) target = $region24
        $region23: #{tpu_custom_call.1} parent=11 // pred_region
          _
        $region24: #{tpu_custom_call.1} parent=11 // pred_fallthru
          _
        // Predicated region
        $region25: #{tpu_custom_call.1} parent=11 // pred_check
          %p175 = pneg %p125
        $region26: #{tpu_custom_call.1} parent=11 // pred_check_branch
          %177 = sbr.rel (%p175) target = $region28
        $region27: #{tpu_custom_call.1} parent=11 // pred_region
          _
        $region28: #{tpu_custom_call.1} parent=11 // pred_fallthru
          _
      $region12: #{tpu_custom_call.1} parent=5 // pred_fallthru
        _
      %p178 = scmp.lt.s32.totalorder %s15, 2
      // Predicated region
      $region29: #{tpu_custom_call.1} parent=5 // pred_check
        %p179 = pneg %p178
      $region30: #{tpu_custom_call.1} parent=5 // pred_check_branch
        %181 = sbr.rel (%p179) target = $region32
      $region31: #{tpu_custom_call.1} parent=5 // pred_region
        // Predicated region
        $region33: #{tpu_custom_call.1} parent=31 // pred_check
          %p182 = pneg %p35
        $region34: #{tpu_custom_call.1} parent=31 // pred_check_branch
          %184 = sbr.rel (%p182) target = $region36
        $region35: #{tpu_custom_call.1} parent=31 // pred_region
          %s185 = smul.u32 16, %s15
          %p186 = scmp.lt.s32.totalorder %s185, 31
          %s187 = scalar_select %p186, %s185, 31
          %s188 = smul.addr %s187, 8
          %s189 = scalar_lea.vmem %s0, %s188
          %s190 = smul.u32 16, %s15
        $region36: #{tpu_custom_call.1} parent=31 // pred_fallthru
          _
      $region32: #{tpu_custom_call.1} parent=5 // pred_fallthru
        _
      %p191 = scmp.le.s32.totalorder 1, %s15
      %p192 = scmp.lt.s32.totalorder %s15, 3
      %p193 = pnand %p191, %p192
      %p194 = pneg %p193
      // Predicated region
      $region37: #{tpu_custom_call.1} parent=5 // pred_check
        _
      $region38: #{tpu_custom_call.1} parent=5 // pred_check_branch
        %196 = sbr.rel (%p193) target = $region40
      $region39: #{tpu_custom_call.1} parent=5 // pred_region
        %s197 = ssub.s32 %s15, 1
        %s198 = smul.u32 16, %s20
        %p199 = scmp.lt.s32.totalorder %s198, 31
        %s200 = scalar_select %p199, %s198, 31
        %s201 = smul.addr %s200, 8
        %s202 = scalar_lea.vmem %s0, %s201
        %p203 = pneg %p41
        %p204 = pneg %p38
        %p205 = pneg %p62
        %p206 = pneg %p59
        %p207 = pneg %p83
        %p208 = pneg %p80
        %p209 = pneg %p104
        %p210 = pneg %p101
        %p211 = pneg %p125
        %p212 = pneg %p122
        %p213 = pneg %p151
        %p214 = pneg %p148
        %s215 = sand.u32 %s138, 1
        %s216 = scalar_lea.sflag [#allocation4], %s215
        %s217 = sand.u32 %s138, 1
        %s218 = scalar_lea.vmem [#allocation3], %s217
        %s219 = smul.u32 16, %s20
        %p220 = scmp.lt.s32.totalorder %s219, 31
        %s221 = scalar_select %p220, %s219, 31
        %s222 = smul.addr %s221, 8
        %s223 = scalar_lea.vmem %s0, %s222
        %s224 = smul.u32 16, %s20
        %v225 = vld [vmem:[%s223] sm:$0xff]
        %v226 = vld [vmem:[%s223 + $0x8] sm:$0xff]
        %v227 = vld [vmem:[%s223 + $0x10] sm:$0xff]
        %v228 = vld [vmem:[%s223 + $0x18] sm:$0xff]
        %v229 = vld [vmem:[%s223 + $0x20] sm:$0xff]
        %v230 = vld [vmem:[%s223 + $0x28] sm:$0xff]
        %v231 = vld [vmem:[%s223 + $0x30] sm:$0xff]
        %v232 = vld [vmem:[%s223 + $0x38] sm:$0xff]
        %v233 = vld [vmem:[%s223 + $0x40] sm:$0xff]
        %v234 = vld [vmem:[%s223 + $0x48] sm:$0xff]
        %v235 = vld [vmem:[%s223 + $0x50] sm:$0xff]
        %v236 = vld [vmem:[%s223 + $0x58] sm:$0xff]
        %v237 = vld [vmem:[%s223 + $0x60] sm:$0xff]
        %v238 = vld [vmem:[%s223 + $0x68] sm:$0xff]
        %v239 = vld [vmem:[%s223 + $0x70] sm:$0xff]
        %v240 = vld [vmem:[%s223 + $0x78] sm:$0xff]
        %v241 = vld [vmem:[%s1] sm:$0xff]
        %v242 = vld [vmem:[%s1 + $0x8] sm:$0xff]
        %v243 = vld [vmem:[%s2] sm:$0x1]
        %v245 = vlaneseq
        %v246 = vshrl.u32 %v245, 7
        %v247 = vsub.s32 0, %v246
        %v248 = vrot.slane %v243, %v247
        %vm250 = vcmask 130048
        %v252 = vsel %vm250, %v225, 0
        %v255 = vsel %vm250, %v226, 0
        %v258 = vsel %vm250, %v227, 0
        %v261 = vsel %vm250, %v228, 0
        %v264 = vsel %vm250, %v229, 0
        %v267 = vsel %vm250, %v230, 0
        %v270 = vsel %vm250, %v231, 0
        %v273 = vsel %vm250, %v232, 0
        %v276 = vsel %vm250, %v233, 0
        %v279 = vsel %vm250, %v234, 0
        %v282 = vsel %vm250, %v235, 0
        %v285 = vsel %vm250, %v236, 0
        %v288 = vsel %vm250, %v237, 0
        %v291 = vsel %vm250, %v238, 0
        %v294 = vsel %vm250, %v239, 0
        %v297 = vsel %vm250, %v240, 0
        %299 = vmatprep.subr.mxu0 0.0
        %300 = vmatpush1.msra.mxu0 %v241
        %301 = vmatprep.subr.mxu0 0.0
        %302 = vmatpush1.msra.mxu0 %v242
        %303 = vmatprep.subr.mxu0 0.0
        %304 = vmatpush1.msra.mxu0 0.0
        %305 = vmatprep.subr.mxu0 0.0
        %306 = vmatpush1.msra.mxu0 0.0
        %307 = vmatprep.subr.mxu0 0.0
        %308 = vmatpush1.msra.mxu0 0.0
        %309 = vmatprep.subr.mxu0 0.0
        %310 = vmatpush1.msra.mxu0 0.0
        %311 = vmatprep.subr.mxu0 0.0
        %312 = vmatpush1.msra.mxu0 0.0
        %313 = vmatprep.subr.mxu0 0.0
        %314 = vmatpush1.msra.mxu0 0.0
        %315 = vmatprep.subr.mxu0 0.0
        %316 = vmatpush1.msra.mxu0 0.0
        %317 = vmatprep.subr.mxu0 0.0
        %318 = vmatpush1.msra.mxu0 0.0
        %319 = vmatprep.subr.mxu0 0.0
        %320 = vmatpush1.msra.mxu0 0.0
        %321 = vmatprep.subr.mxu0 0.0
        %322 = vmatpush1.msra.mxu0 0.0
        %323 = vmatprep.subr.mxu0 0.0
        %324 = vmatpush1.msra.mxu0 0.0
        %325 = vmatprep.subr.mxu0 0.0
        %326 = vmatpush1.msra.mxu0 0.0
        %327 = vmatprep.subr.mxu0 0.0
        %328 = vmatpush1.msra.mxu0 0.0
        %329 = vmatprep.subr.mxu0 0.0
        %330 = vmatpush1.msra.mxu0 0.0
        %331 = vmatprep.subr.mxu0 0.0
        %332 = vmatpush1.msra.mxu0 0.0
        %333 = vmatprep.subr.mxu0 0.0
        %334 = vmatpush1.msra.mxu0 0.0
        %335 = vmatprep.subr.mxu0 0.0
        %336 = vmatpush1.msra.mxu0 0.0
        %337 = vmatprep.subr.mxu0 0.0
        %338 = vmatpush1.msra.mxu0 0.0
        %339 = vmatprep.subr.mxu0 0.0
        %340 = vmatpush1.msra.mxu0 0.0
        %341 = vmatprep.subr.mxu0 0.0
        %342 = vmatpush1.msra.mxu0 0.0
        %343 = vmatprep.subr.mxu0 0.0
        %344 = vmatpush1.msra.mxu0 0.0
        %345 = vmatprep.subr.mxu0 0.0
        %346 = vmatpush1.msra.mxu0 0.0
        %347 = vmatprep.subr.mxu0 0.0
        %348 = vmatpush1.msra.mxu0 0.0
        %349 = vmatprep.subr.mxu0 0.0
        %350 = vmatpush1.msra.mxu0 0.0
        %351 = vmatprep.subr.mxu0 0.0
        %352 = vmatpush1.msra.mxu0 0.0
        %353 = vmatprep.subr.mxu0 0.0
        %354 = vmatpush1.msra.mxu0 0.0
        %355 = vmatprep.subr.mxu0 0.0
        %356 = vmatpush1.msra.mxu0 0.0
        %357 = vmatprep.subr.mxu0 0.0
        %358 = vmatpush1.msra.mxu0 0.0
        %359 = vmatprep.subr.mxu0 0.0
        %360 = vmatpush1.msra.mxu0 0.0
        %361 = vmatprep.subr.mxu0 0.0
        %362 = vmatpush1.msra.mxu0 0.0
        %363 = vmatprep.mubr.f32.mxu0 0.0
        %364 = vmatmul.mubr.f32.gmra.mrb[0].mxu0 %v252
        %v365 = vpop.f32.mrb[0].mxu0
        %v366 = vadd.f32 %v248, %v365
        %v367 = vpop.f32.mrb[0].mxu0
        %368 = vmatprep.mubr.f32.mxu0 0.0
        %369 = vmatmul.mubr.f32.gmra.mrb[0].mxu0 %v255
        %v370 = vpop.f32.mrb[0].mxu0
        %v371 = vadd.f32 %v248, %v370
        %v372 = vpop.f32.mrb[0].mxu0
        %373 = vmatprep.mubr.f32.mxu0 0.0
        %374 = vmatmul.mubr.f32.gmra.mrb[0].mxu0 %v258
        %v375 = vpop.f32.mrb[0].mxu0
        %v376 = vadd.f32 %v248, %v375
        %v377 = vpop.f32.mrb[0].mxu0
        %378 = vmatprep.mubr.f32.mxu0 0.0
        %379 = vmatmul.mubr.f32.gmra.mrb[0].mxu0 %v261
        %v380 = vpop.f32.mrb[0].mxu0
        %v381 = vadd.f32 %v248, %v380
        %v382 = vpop.f32.mrb[0].mxu0
        %383 = vmatprep.mubr.f32.mxu0 0.0
        %384 = vmatmul.mubr.f32.gmra.mrb[0].mxu0 %v264
        %v385 = vpop.f32.mrb[0].mxu0
        %v386 = vadd.f32 %v248, %v385
        %v387 = vpop.f32.mrb[0].mxu0
        %388 = vmatprep.mubr.f32.mxu0 0.0
        %389 = vmatmul.mubr.f32.gmra.mrb[0].mxu0 %v267
        %v390 = vpop.f32.mrb[0].mxu0
        %v391 = vadd.f32 %v248, %v390
        %v392 = vpop.f32.mrb[0].mxu0
        %393 = vmatprep.mubr.f32.mxu0 0.0
        %394 = vmatmul.mubr.f32.gmra.mrb[0].mxu0 %v270
        %v395 = vpop.f32.mrb[0].mxu0
        %v396 = vadd.f32 %v248, %v395
        %v397 = vpop.f32.mrb[0].mxu0
        %398 = vmatprep.mubr.f32.mxu0 0.0
        %399 = vmatmul.mubr.f32.gmra.mrb[0].mxu0 %v273
        %v400 = vpop.f32.mrb[0].mxu0
        %v401 = vadd.f32 %v248, %v400
        %v402 = vpop.f32.mrb[0].mxu0
        %403 = vmatprep.mubr.f32.mxu0 0.0
        %404 = vmatmul.mubr.f32.gmra.mrb[0].mxu0 %v276
        %v405 = vpop.f32.mrb[0].mxu0
        %v406 = vadd.f32 %v248, %v405
        %v407 = vpop.f32.mrb[0].mxu0
        %408 = vmatprep.mubr.f32.mxu0 0.0
        %409 = vmatmul.mubr.f32.gmra.mrb[0].mxu0 %v279
        %v410 = vpop.f32.mrb[0].mxu0
        %v411 = vadd.f32 %v248, %v410
        %v412 = vpop.f32.mrb[0].mxu0
        %413 = vmatprep.mubr.f32.mxu0 0.0
        %414 = vmatmul.mubr.f32.gmra.mrb[0].mxu0 %v282
        %v415 = vpop.f32.mrb[0].mxu0
        %v416 = vadd.f32 %v248, %v415
        %v417 = vpop.f32.mrb[0].mxu0
        %418 = vmatprep.mubr.f32.mxu0 0.0
        %419 = vmatmul.mubr.f32.gmra.mrb[0].mxu0 %v285
        %v420 = vpop.f32.mrb[0].mxu0
        %v421 = vadd.f32 %v248, %v420
        %v422 = vpop.f32.mrb[0].mxu0
        %423 = vmatprep.mubr.f32.mxu0 0.0
        %424 = vmatmul.mubr.f32.gmra.mrb[0].mxu0 %v288
        %v425 = vpop.f32.mrb[0].mxu0
        %v426 = vadd.f32 %v248, %v425
        %v427 = vpop.f32.mrb[0].mxu0
        %428 = vmatprep.mubr.f32.mxu0 0.0
        %429 = vmatmul.mubr.f32.gmra.mrb[0].mxu0 %v291
        %v430 = vpop.f32.mrb[0].mxu0
        %v431 = vadd.f32 %v248, %v430
        %v432 = vpop.f32.mrb[0].mxu0
        %433 = vmatprep.mubr.f32.mxu0 0.0
        %434 = vmatmul.mubr.f32.gmra.mrb[0].mxu0 %v294
        %v435 = vpop.f32.mrb[0].mxu0
        %v436 = vadd.f32 %v248, %v435
        %v437 = vpop.f32.mrb[0].mxu0
        %438 = vmatprep.mubr.f32.mxu0 0.0
        %439 = vmatmul.mubr.f32.gmra.mrb[0].mxu0 %v297
        %v440 = vpop.f32.mrb[0].mxu0
        %v441 = vadd.f32 %v248, %v440
        %v442 = vpop.f32.mrb[0].mxu0
        %443 = vdwg.mxu0
        %v444 = vmax.f32 %v366, 0.0
        %v445 = vmax.f32 %v371, 0.0
        %v446 = vmax.f32 %v376, 0.0
        %v447 = vmax.f32 %v381, 0.0
        %v448 = vmax.f32 %v386, 0.0
        %v449 = vmax.f32 %v391, 0.0
        %v450 = vmax.f32 %v396, 0.0
        %v451 = vmax.f32 %v401, 0.0
        %v452 = vmax.f32 %v406, 0.0
        %v453 = vmax.f32 %v411, 0.0
        %v454 = vmax.f32 %v416, 0.0
        %v455 = vmax.f32 %v421, 0.0
        %v456 = vmax.f32 %v426, 0.0
        %v457 = vmax.f32 %v431, 0.0
        %v458 = vmax.f32 %v436, 0.0
        %v459 = vmax.f32 %v441, 0.0
        %v460 = vld [vmem:[%s3] sm:$0x1]
        %v462 = vlaneseq
        %v463 = vshrl.u32 %v462, 7
        %v464 = vsub.s32 0, %v463
        %v465 = vrot.slane %v460, %v464
        %v467 = vmul.f32 %v444, %v465
        %v468 = vmul.f32 %v445, %v465
        %v469 = vmul.f32 %v446, %v465
        %v470 = vmul.f32 %v447, %v465
        %v471 = vmul.f32 %v448, %v465
        %v472 = vmul.f32 %v449, %v465
        %v473 = vmul.f32 %v450, %v465
        %v474 = vmul.f32 %v451, %v465
        %v475 = vmul.f32 %v452, %v465
        %v476 = vmul.f32 %v453, %v465
        %v477 = vmul.f32 %v454, %v465
        %v478 = vmul.f32 %v455, %v465
        %v479 = vmul.f32 %v456, %v465
        %v480 = vmul.f32 %v457, %v465
        %v481 = vmul.f32 %v458, %v465
        %v482 = vmul.f32 %v459, %v465
        %vm483 = vcmask 261120
        %v484 = vsel %vm483, %v467, 0.0
        %485 = vadd.xlane.f32.xlu0 %v484
        %v486 = vpop.xlane.xlu0 %485
        %v487 = vsel %vm483, %v468, 0.0
        %488 = vadd.xlane.f32.xlu0 %v487
        %v489 = vpop.xlane.xlu0 %488
        %v490 = vsel %vm483, %v469, 0.0
        %491 = vadd.xlane.f32.xlu0 %v490
        %v492 = vpop.xlane.xlu0 %491
        %v493 = vsel %vm483, %v470, 0.0
        %494 = vadd.xlane.f32.xlu0 %v493
        %v495 = vpop.xlane.xlu0 %494
        %v496 = vsel %vm483, %v471, 0.0
        %497 = vadd.xlane.f32.xlu0 %v496
        %v498 = vpop.xlane.xlu0 %497
        %v499 = vsel %vm483, %v472, 0.0
        %500 = vadd.xlane.f32.xlu0 %v499
        %v501 = vpop.xlane.xlu0 %500
        %v502 = vsel %vm483, %v473, 0.0
        %503 = vadd.xlane.f32.xlu0 %v502
        %v504 = vpop.xlane.xlu0 %503
        %v505 = vsel %vm483, %v474, 0.0
        %506 = vadd.xlane.f32.xlu0 %v505
        %v507 = vpop.xlane.xlu0 %506
        %v508 = vsel %vm483, %v475, 0.0
        %509 = vadd.xlane.f32.xlu0 %v508
        %v510 = vpop.xlane.xlu0 %509
        %v511 = vsel %vm483, %v476, 0.0
        %512 = vadd.xlane.f32.xlu0 %v511
        %v513 = vpop.xlane.xlu0 %512
        %v514 = vsel %vm483, %v477, 0.0
        %515 = vadd.xlane.f32.xlu0 %v514
        %v516 = vpop.xlane.xlu0 %515
        %v517 = vsel %vm483, %v478, 0.0
        %518 = vadd.xlane.f32.xlu0 %v517
        %v519 = vpop.xlane.xlu0 %518
        %v520 = vsel %vm483, %v479, 0.0
        %521 = vadd.xlane.f32.xlu0 %v520
        %v522 = vpop.xlane.xlu0 %521
        %v523 = vsel %vm483, %v480, 0.0
        %524 = vadd.xlane.f32.xlu0 %v523
        %v525 = vpop.xlane.xlu0 %524
        %v526 = vsel %vm483, %v481, 0.0
        %527 = vadd.xlane.f32.xlu0 %v526
        %v528 = vpop.xlane.xlu0 %527
        %v529 = vsel %vm483, %v482, 0.0
        %530 = vadd.xlane.f32.xlu0 %v529
        %v531 = vpop.xlane.xlu0 %530
        %s532 = sld [smem:[#allocation2]]
        %v533 = vstv %s532
        %v534 = vadd.f32 %v486, %v533
        %v535 = vadd.f32 %v489, %v533
        %v536 = vadd.f32 %v492, %v533
        %v537 = vadd.f32 %v495, %v533
        %v538 = vadd.f32 %v498, %v533
        %v539 = vadd.f32 %v501, %v533
        %v540 = vadd.f32 %v504, %v533
        %v541 = vadd.f32 %v507, %v533
        %v542 = vadd.f32 %v510, %v533
        %v543 = vadd.f32 %v513, %v533
        %v544 = vadd.f32 %v516, %v533
        %v545 = vadd.f32 %v519, %v533
        %v546 = vadd.f32 %v522, %v533
        %v547 = vadd.f32 %v525, %v533
        %v548 = vadd.f32 %v528, %v533
        %v549 = vadd.f32 %v531, %v533
        %v566 = vlaneseq
        %v567 = vand.u32 %v566, 127
        %v568 = vlaneseq
        %v569 = vshrl.u32 %v568, 7
        %v570 = vsub.s32 %v567, %v569
        %v571 = vrot.slane %v534, %v570
        %v572 = vadd.s32 %v567, 4294967288
        %v573 = vlaneseq
        %v574 = vshrl.u32 %v573, 7
        %v575 = vsub.s32 %v572, %v574
        %v576 = vrot.slane %v535, %v575
        %vm577 = vcmask 130112
        %v578 = vsel %vm577, %v576, %v571
        %v579 = vadd.s32 %v567, 4294967280
        %v580 = vlaneseq
        %v581 = vshrl.u32 %v580, 7
        %v582 = vsub.s32 %v579, %v581
        %v583 = vrot.slane %v536, %v582
        %vm584 = vcmask 195712
        %v585 = vsel %vm584, %v583, %v578
        %v586 = vadd.s32 %v567, 4294967272
        %v587 = vlaneseq
        %v588 = vshrl.u32 %v587, 7
        %v589 = vsub.s32 %v586, %v588
        %v590 = vrot.slane %v537, %v589
        %vm591 = vcmask 261312
        %v592 = vsel %vm591, %v590, %v585
        %v593 = vadd.s32 %v567, 4294967264
        %v594 = vlaneseq
        %v595 = vshrl.u32 %v594, 7
        %v596 = vsub.s32 %v593, %v595
        %v597 = vrot.slane %v538, %v596
        %vm598 = vcmask 326912
        %v599 = vsel %vm598, %v597, %v592
        %v600 = vadd.s32 %v567, 4294967256
        %v601 = vlaneseq
        %v602 = vshrl.u32 %v601, 7
        %v603 = vsub.s32 %v600, %v602
        %v604 = vrot.slane %v539, %v603
        %vm605 = vcmask 392512
        %v606 = vsel %vm605, %v604, %v599
        %v607 = vadd.s32 %v567, 4294967248
        %v608 = vlaneseq
        %v609 = vshrl.u32 %v608, 7
        %v610 = vsub.s32 %v607, %v609
        %v611 = vrot.slane %v540, %v610
        %vm612 = vcmask 458112
        %v613 = vsel %vm612, %v611, %v606
        %v614 = vadd.s32 %v567, 4294967240
        %v615 = vlaneseq
        %v616 = vshrl.u32 %v615, 7
        %v617 = vsub.s32 %v614, %v616
        %v618 = vrot.slane %v541, %v617
        %vm619 = vcmask 523712
        %v620 = vsel %vm619, %v618, %v613
        %v621 = vadd.s32 %v567, 4294967232
        %v622 = vlaneseq
        %v623 = vshrl.u32 %v622, 7
        %v624 = vsub.s32 %v621, %v623
        %v625 = vrot.slane %v542, %v624
        %vm626 = vcmask 589312
        %v627 = vsel %vm626, %v625, %v620
        %v628 = vadd.s32 %v567, 4294967224
        %v629 = vlaneseq
        %v630 = vshrl.u32 %v629, 7
        %v631 = vsub.s32 %v628, %v630
        %v632 = vrot.slane %v543, %v631
        %vm633 = vcmask 654912
        %v634 = vsel %vm633, %v632, %v627
        %v635 = vadd.s32 %v567, 4294967216
        %v636 = vlaneseq
        %v637 = vshrl.u32 %v636, 7
        %v638 = vsub.s32 %v635, %v637
        %v639 = vrot.slane %v544, %v638
        %vm640 = vcmask 720512
        %v641 = vsel %vm640, %v639, %v634
        %v642 = vadd.s32 %v567, 4294967208
        %v643 = vlaneseq
        %v644 = vshrl.u32 %v643, 7
        %v645 = vsub.s32 %v642, %v644
        %v646 = vrot.slane %v545, %v645
        %vm647 = vcmask 786112
        %v648 = vsel %vm647, %v646, %v641
        %v649 = vadd.s32 %v567, 4294967200
        %v650 = vlaneseq
        %v651 = vshrl.u32 %v650, 7
        %v652 = vsub.s32 %v649, %v651
        %v653 = vrot.slane %v546, %v652
        %vm654 = vcmask 851712
        %v655 = vsel %vm654, %v653, %v648
        %v656 = vadd.s32 %v567, 4294967192
        %v657 = vlaneseq
        %v658 = vshrl.u32 %v657, 7
        %v659 = vsub.s32 %v656, %v658
        %v660 = vrot.slane %v547, %v659
        %vm661 = vcmask 917312
        %v662 = vsel %vm661, %v660, %v655
        %v663 = vadd.s32 %v567, 4294967184
        %v664 = vlaneseq
        %v665 = vshrl.u32 %v664, 7
        %v666 = vsub.s32 %v663, %v665
        %v667 = vrot.slane %v548, %v666
        %vm668 = vcmask 982912
        %v669 = vsel %vm668, %v667, %v662
        %v670 = vadd.s32 %v567, 4294967176
        %v671 = vlaneseq
        %v672 = vshrl.u32 %v671, 7
        %v673 = vsub.s32 %v670, %v672
        %v674 = vrot.slane %v549, %v673
        %vm675 = vcmask 1048512
        %v676 = vsel %vm675, %v674, %v669
        %678 = vst [vmem:[%s218] sm:$0x1] %v676
        %s679 = sand.u32 %s138, 1
        %s680 = scalar_lea.sflag [#allocation4], %s679
        %s681 = sand.u32 %s138, 1
        %s682 = scalar_lea.vmem [#allocation3], %s681
        // Predicated region
        $region41: #{tpu_custom_call.1} parent=39 // pred_check
          %p683 = pneg %p148
        $region42: #{tpu_custom_call.1} parent=39 // pred_check_branch
          %685 = sbr.rel (%p683) target = $region44
        $region43: #{tpu_custom_call.1} parent=39 // pred_region
          %s687 = ssub.s32 16, 16
          %688 = vsyncadd %s680, %s687
          %s689 = smul.addr %s20, 16
          %s690 = scalar_lea.hbm %s5, %s689
          %s692 = sshll.u32 %s682, 4
          %s693 = int_to_ptr.vmem [resolvable:$true] %s692
          %695 = dma.vmem_to_hbm [thread:$0]  %s693, 16, %s690, %s680
        $region44: #{tpu_custom_call.1} parent=39 // pred_fallthru
          _
      $region40: #{tpu_custom_call.1} parent=5 // pred_fallthru
        _
      %p696 = scmp.le.s32.totalorder 2, %s15
      // Predicated region
      $region45: #{tpu_custom_call.1} parent=5 // pred_check
        %p697 = pneg %p696
      $region46: #{tpu_custom_call.1} parent=5 // pred_check_branch
        %699 = sbr.rel (%p697) target = $region48
      $region47: #{tpu_custom_call.1} parent=5 // pred_region
        %s700 = ssub.s32 %s15, 2
        // Predicated region
        $region49: #{tpu_custom_call.1} parent=47 // pred_check
          %p701 = pneg %p154
        $region50: #{tpu_custom_call.1} parent=47 // pred_check_branch
          %703 = sbr.rel (%p701) target = $region52
        $region51: #{tpu_custom_call.1} parent=47 // pred_region
          %s704 = sand.u32 %s139, 1
          %s705 = scalar_lea.sflag [#allocation4], %s704
          %s706 = sand.u32 %s139, 1
          %s707 = scalar_lea.vmem [#allocation3], %s706
          %708 = dma.done %s705, 16
        $region52: #{tpu_custom_call.1} parent=47 // pred_fallthru
          _
      $region48: #{tpu_custom_call.1} parent=5 // pred_fallthru
        _
    $region6: #{tpu_custom_call.1} parent=1 // loop_footer
      %s19 = sadd.s32 1, %s15
    $region7: #{tpu_custom_call.1} parent=1 // loop_footer_branch
      %14 = sbr.rel target = $region3
    $region8: #{tpu_custom_call.1} parent=1 // loop_exit
      _
    %709 = vsyncpa [#allocation4], 1
    %s710 = scalar_lea.sflag [#allocation4], 1
    %711 = vsyncpa %s710, 1

</llo_original>
